<compile_context>
chip_gen: v6e
topology: v6e:2x2x1
jax: 0.10.0
libtpu: 0.0.40
codegen_flags: <defaults>
</compile_context>

<pallas_src>
import functools
import math

import jax
import jax.numpy as jnp
from jax.experimental import pallas as pl
from jax.experimental.pallas import tpu as pltpu


def _conv_bn_relu_kernel(x_ref, w_ref, scale_ref, shift_ref, o_ref, *scratch,
                         taps, out_len, pad_copy):
    # x_ref:     (1, Cin, H*W)     unpadded activation slab, flattened spatial on lanes
    # w_ref:     (KH*KW, Cout, Cin) one (Cout, Cin) matrix per conv tap
    # scale_ref: (Cout, 1) f32     folded BN scale
    # shift_ref: (Cout, 1) f32     folded BN shift (includes conv bias)
    # o_ref:     (1, Cout, out_len)
    # scratch:   optionally one VMEM ref (Cin, L_pad) used as zero-padded slab (K>1)
    if pad_copy is None:
        src = x_ref[0]                                # (Cin, S): pointwise fast path
    else:
        H, W, W_pad, pad = pad_copy
        xpad_ref, = scratch
        # Build the zero-padded, flattened slab in VMEM (no HBM round trip):
        # memset borders (+1 trailing zero row), then copy the H interior rows.
        xpad_ref[...] = jnp.zeros_like(xpad_ref)
        xb = x_ref[0]                                 # (Cin, H*W), load once
        for r in range(H):                            # static unroll over image rows
            dst = (r + pad) * W_pad + pad
            xpad_ref[:, dst:dst + W] = xb[:, r * W:(r + 1) * W]
        src = xpad_ref[...]

    acc = None
    for t, off in enumerate(taps):                    # static unroll over conv taps
        xs = src[:, off:off + out_len]                # static shifted slice
        c = jnp.dot(w_ref[t], xs, preferred_element_type=jnp.float32)
        acc = c if acc is None else acc + c
    acc = acc * scale_ref[...] + shift_ref[...]       # folded BatchNorm (+ conv bias)
    o_ref[0] = jnp.maximum(acc, 0.0).astype(o_ref.dtype)   # ReLU


def _pick_spatial_tile(s, max_tile):
    """Largest lane-dense (multiple-of-128) divisor of s that is <= max_tile,
    falling back to the full extent (always a legal block)."""
    if s <= max_tile:
        return s
    t = (max_tile // 128) * 128
    while t >= 128:
        if s % t == 0:
            return t
        t -= 128
    return s


@functools.partial(jax.jit, static_argnames=("padding", "max_tile"))
def conv_bn_relu_forward(x, weight, bias, gamma, beta, running_mean, running_var,
                         eps=1e-5, *, padding=0, max_tile=4096):
    """Conv2d(stride=1, dilation=1, groups=1, zero padding) + folded BatchNorm2d
    (inference) + ReLU. NCHW in / NCHW out.

    x: (N, Cin, H, W); weight: (Cout, Cin, KH, KW); other params: (Cout,)
    """
    # TODO(synk): stride>1, dilation>1, groups>1, tuple padding, non-'zeros'
    # padding_mode and training-mode BatchNorm (batch stats + running-stat
    # updates) are not implemented; BN is folded in inference mode. Very large
    # images on the K>1 path would additionally want output-row tiling.
    N, Cin, H, W = x.shape
    Cout, Cin_w, KH, KW = weight.shape
    assert Cin_w == Cin, "groups=1 only"
    H_out = H + 2 * padding - KH + 1
    W_out = W + 2 * padding - KW + 1

    # Fold BN (inference) + conv bias: y = relu((W*x + b - mean)*g/sqrt(v+eps) + beta)
    scale = (gamma / jnp.sqrt(running_var + eps)).astype(jnp.float32)
    shift = (bias - running_mean).astype(jnp.float32) * scale + beta.astype(jnp.float32)
    scale2 = scale.reshape(Cout, 1)
    shift2 = shift.reshape(Cout, 1)

    # Conv taps: (KH*KW, Cout, Cin), tap t = ky*KW + kx. Tiny tensor; match x dtype.
    w_taps = jnp.transpose(weight, (2, 3, 0, 1)).reshape(KH * KW, Cout, Cin).astype(x.dtype)

    S = H * W
    x_flat = x.reshape(N, Cin, S)                     # free reshape, NCHW kept, unpadded

    if KH == 1 and KW == 1 and padding == 0:
        # Pointwise fast path: tile the lane-dense flattened spatial axis.
        tile = _pick_spatial_tile(S, max_tile)
        n_sp = S // tile
        out_len = tile
        out_last = S
        wide_w = W
        taps = (0,)
        grid = (N, n_sp)
        in_specs = [
            pl.BlockSpec((1, Cin, tile), lambda n, s: (n, 0, s)),
            pl.BlockSpec((1, Cout, Cin), lambda n, s: (0, 0, 0)),
            pl.BlockSpec((Cout, 1), lambda n, s: (0, 0)),
            pl.BlockSpec((Cout, 1), lambda n, s: (0, 0)),
        ]
        out_specs = pl.BlockSpec((1, Cout, tile), lambda n, s: (n, 0, s))
        scratch_shapes = []
        dims = ("parallel", "parallel")
        pad_copy = None
    else:
        # General K, stride 1: the kernel builds the zero-padded flat slab in a
        # VMEM scratch (row stride W_pad, plus one extra zero row so the tap
        # shifts of the last wide row's throwaway columns stay in bounds) and
        # writes "wide" output rows (W_pad columns, K-1 junk cols per row).
        H_pad, W_pad = H + 2 * padding, W + 2 * padding
        L_pad = (H_pad + 1) * W_pad
        out_len = H_out * W_pad
        out_last = out_len
        wide_w = W_pad
        taps = tuple(ky * W_pad + kx for ky in range(KH) for kx in range(KW))
        grid = (N,)
        in_specs = [
            pl.BlockSpec((1, Cin, S), lambda n: (n, 0, 0)),
            pl.BlockSpec((KH * KW, Cout, Cin), lambda n: (0, 0, 0)),
            pl.BlockSpec((Cout, 1), lambda n: (0, 0)),
            pl.BlockSpec((Cout, 1), lambda n: (0, 0)),
        ]
        out_specs = pl.BlockSpec((1, Cout, out_len), lambda n: (n, 0, 0))
        scratch_shapes = [pltpu.VMEM((Cin, L_pad), x.dtype)]
        dims = ("parallel",)
        pad_copy = (H, W, W_pad, padding)

    kernel = functools.partial(_conv_bn_relu_kernel, taps=taps, out_len=out_len,
                               pad_copy=pad_copy)

    itemsize = x.dtype.itemsize
    cost = pl.CostEstimate(
        flops=2 * N * Cout * H_out * W_out * Cin * KH * KW,
        transcendentals=0,
        bytes_accessed=(N * Cin * S * itemsize
                        + w_taps.size * itemsize
                        + N * Cout * out_last * itemsize),
    )

    out_flat = pl.pallas_call(
        kernel,
        out_shape=jax.ShapeDtypeStruct((N, Cout, out_last), x.dtype),
        grid_spec=pltpu.PrefetchScalarGridSpec(
            num_scalar_prefetch=0,
            grid=grid,
            in_specs=in_specs,
            out_specs=out_specs,
            scratch_shapes=scratch_shapes,
        ),
        compiler_params=pltpu.CompilerParams(dimension_semantics=dims),
        cost_estimate=cost,
    )(x_flat, w_taps, scale2, shift2)

    # (N, Cout, H_out*wide_w) -> (N, Cout, H_out, wide_w) is free; for K>1 drop
    # the K-1 throwaway columns per wide row.
    out = out_flat.reshape(N, Cout, H_out, wide_w)
    if wide_w != W_out:
        out = out[:, :, :, :W_out]
    return out


def reference_forward(x, weight, bias, gamma, beta, mean, var, eps, padding):
    # Pure-JAX reference: Conv2d (NCHW) + eval-mode BatchNorm2d + ReLU.
    y = jax.lax.conv_general_dilated(
        x, weight, window_strides=(1, 1),
        padding=[(padding, padding), (padding, padding)],
        dimension_numbers=("NCHW", "OIHW", "NCHW"),
        precision=jax.lax.Precision.HIGHEST)
    y = y + bias[None, :, None, None]
    y = (y - mean[None, :, None, None]) * (gamma / jnp.sqrt(var + eps))[None, :, None, None]
    y = y + beta[None, :, None, None]
    return jnp.maximum(y, 0.0)


if __name__ == "__main__":
    key = jax.random.PRNGKey(0)
    N, Cin, H, W, Cout = 2, 4, 16, 16, 8
    kx, *pkeys = jax.random.split(key, 13)
    x = jax.random.normal(kx, (N, Cin, H, W), dtype=jnp.float32)

    # Exercise both the pointwise fast path (K=1) and the general conv (K=3, pad=1).
    for cfg_i, (K, pad) in enumerate([(1, 0), (3, 1)]):
        kw, kb, kg, kbe, km, kv = pkeys[cfg_i * 6:(cfg_i + 1) * 6]
        bound = 1.0 / math.sqrt(Cin * K * K)
        weight = jax.random.uniform(kw, (Cout, Cin, K, K), minval=-bound, maxval=bound,
                                    dtype=jnp.float32)
        bias = jax.random.uniform(kb, (Cout,), minval=-bound, maxval=bound,
                                  dtype=jnp.float32)
        gamma = jax.random.uniform(kg, (Cout,), minval=0.5, maxval=1.5, dtype=jnp.float32)
        beta = 0.1 * jax.random.normal(kbe, (Cout,), dtype=jnp.float32)
        r_mean = 0.1 * jax.random.normal(km, (Cout,), dtype=jnp.float32)
        r_var = jax.random.uniform(kv, (Cout,), minval=0.5, maxval=1.5, dtype=jnp.float32)

        out = conv_bn_relu_forward(x, weight, bias, gamma, beta, r_mean, r_var,
                                   padding=pad)
        out = jax.block_until_ready(out)

        ref = reference_forward(x, weight, bias, gamma, beta, r_mean, r_var, 1e-5, pad)
        H_out = H + 2 * pad - K + 1
        assert out.shape == (N, Cout, H_out, H_out), out.shape
        assert jnp.allclose(out, ref, atol=1e-4, rtol=1e-4), f"mismatch vs reference (K={K})"

    print("KERNEL_OK")
</pallas_src>

<mosaic_0001>
module attributes {stable_mosaic.version = 11 : i64} {
  func.func @_conv_bn_relu_kernel(%arg0: i32, %arg1: i32, %arg2: memref<1x4x256xf32, #tpu.memory_space<vmem>>, %arg3: memref<1x8x4xf32, #tpu.memory_space<vmem>>, %arg4: memref<8x1xf32, #tpu.memory_space<vmem>>, %arg5: memref<8x1xf32, #tpu.memory_space<vmem>>, %arg6: memref<1x8x256xf32, #tpu.memory_space<vmem>>) attributes {dimension_semantics = [#tpu.dimension_semantics<parallel>, #tpu.dimension_semantics<parallel>], iteration_bounds = array<i64: 2, 1>, scalar_prefetch = 0 : i64, scratch_operands = 0 : i64, tpu.core_type = #tpu.core_type<tc>, window_params = [{transform_indices = @transform_0, window_bounds = array<i64: 1, 4, 256>}, {pipeline_mode = #tpu.pipeline_mode<synchronous>, transform_indices = @transform_1, window_bounds = array<i64: 1, 8, 4>}, {pipeline_mode = #tpu.pipeline_mode<synchronous>, transform_indices = @transform_2, window_bounds = array<i64: 8, 1>}, {pipeline_mode = #tpu.pipeline_mode<synchronous>, transform_indices = @transform_3, window_bounds = array<i64: 8, 1>}, {transform_indices = @transform_4, window_bounds = array<i64: 1, 8, 256>}]} {
    %c0 = arith.constant 0 : index
    %c0_0 = arith.constant 0 : index
    %c0_1 = arith.constant 0 : index
    %0 = vector.load %arg2[%c0, %c0_0, %c0_1] : memref<1x4x256xf32, #tpu.memory_space<vmem>>, vector<1x4x256xf32>
    %1 = vector.shape_cast %0 : vector<1x4x256xf32> to vector<4x256xf32>
    %c0_2 = arith.constant 0 : index
    %c0_3 = arith.constant 0 : index
    %c0_4 = arith.constant 0 : index
    %2 = vector.load %arg3[%c0_2, %c0_3, %c0_4] : memref<1x8x4xf32, #tpu.memory_space<vmem>>, vector<1x8x4xf32>
    %3 = vector.shape_cast %2 : vector<1x8x4xf32> to vector<8x4xf32>
    %cst = arith.constant dense<0.000000e+00> : vector<8x256xf32>
    %4 = tpu.matmul %3, %1, %cst {dimension_numbers = #tpu.dot_dimension_numbers<[1], [0], [0], [1], [0, 0, 1, 1], [], []>} : vector<8x4xf32>, vector<4x256xf32>, vector<8x256xf32> -> vector<8x256xf32>
    %c0_5 = arith.constant 0 : index
    %c0_6 = arith.constant 0 : index
    %5 = vector.load %arg4[%c0_5, %c0_6] : memref<8x1xf32, #tpu.memory_space<vmem>>, vector<8x1xf32>
    %6 = vector.broadcast %5 : vector<8x1xf32> to vector<8x256xf32>
    %7 = arith.mulf %4, %6 : vector<8x256xf32>
    %c0_7 = arith.constant 0 : index
    %c0_8 = arith.constant 0 : index
    %8 = vector.load %arg5[%c0_7, %c0_8] : memref<8x1xf32, #tpu.memory_space<vmem>>, vector<8x1xf32>
    %9 = vector.broadcast %8 : vector<8x1xf32> to vector<8x256xf32>
    %10 = arith.addf %7, %9 : vector<8x256xf32>
    %cst_9 = arith.constant 0.000000e+00 : f32
    %11 = vector.broadcast %cst_9 : f32 to vector<8x256xf32>
    %12 = arith.maximumf %10, %11 : vector<8x256xf32>
    %c0_10 = arith.constant 0 : index
    %c0_11 = arith.constant 0 : index
    %c0_12 = arith.constant 0 : index
    %13 = vector.load %arg6[%c0_10, %c0_11, %c0_12] : memref<1x8x256xf32, #tpu.memory_space<vmem>>, vector<1x8x256xf32>
    %14 = vector.shape_cast %13 : vector<1x8x256xf32> to vector<8x256xf32>
    %15 = vector.shape_cast %12 : vector<8x256xf32> to vector<1x8x256xf32>
    tpu.vector_store %arg6[%c0_10, %c0_11, %c0_12], %15 {strides = array<i32>} : memref<1x8x256xf32, #tpu.memory_space<vmem>>, vector<1x8x256xf32>,
    return
  }
  func.func @transform_0(%arg0: i32, %arg1: i32) -> (i32, i32, i32) {
    %c0_i32 = arith.constant 0 : i32
    %c0_i32_0 = arith.constant 0 : i32
    return %arg0, %c0_i32, %arg1 : i32, i32, i32
  }
  func.func @transform_1(%arg0: i32, %arg1: i32) -> (i32, i32, i32) {
    %c0_i32 = arith.constant 0 : i32
    %c0_i32_0 = arith.constant 0 : i32
    %c0_i32_1 = arith.constant 0 : i32
    %c0_i32_2 = arith.constant 0 : i32
    return %c0_i32, %c0_i32_0, %c0_i32_1 : i32, i32, i32
  }
  func.func @transform_2(%arg0: i32, %arg1: i32) -> (i32, i32) {
    %c0_i32 = arith.constant 0 : i32
    %c0_i32_0 = arith.constant 0 : i32
    %c0_i32_1 = arith.constant 0 : i32
    return %c0_i32, %c0_i32_0 : i32, i32
  }
  func.func @transform_3(%arg0: i32, %arg1: i32) -> (i32, i32) {
    %c0_i32 = arith.constant 0 : i32
    %c0_i32_0 = arith.constant 0 : i32
    %c0_i32_1 = arith.constant 0 : i32
    return %c0_i32, %c0_i32_0 : i32, i32
  }
  func.func @transform_4(%arg0: i32, %arg1: i32) -> (i32, i32, i32) {
    %c0_i32 = arith.constant 0 : i32
    %c0_i32_0 = arith.constant 0 : i32
    return %arg0, %c0_i32, %arg1 : i32, i32, i32
  }
}

</mosaic_0001>

<llo_original>
// kernel: conv_bn_relu_forward.1
$region0: #{conv_bn_relu_forward.1}
  #allocation0 [shape = 'u32[]', space=smem, size = 0x4, offset = 0x4, fixed_abs, tag = 'smem constant byte address 0x4 - core index']
  #allocation1 [shape = 'u32[144,128]{1,0:T(1,128)}', space=vmem, size = 0x12000, scoped, tag = 'internal scratch']
  %s0 = inlined_call_operand.vmem [shape: f32[2,4,256], index: 0, kind: input, shape index: {}]
  %s1 = inlined_call_operand.vmem [shape: f32[1,8,4], index: 1, kind: input, shape index: {}]
  %s2 = inlined_call_operand.vmem [shape: f32[8,1], index: 2, kind: input, shape index: {}]
  %s3 = inlined_call_operand.vmem [shape: f32[8,1], index: 3, kind: input, shape index: {}]
  %s4 = inlined_call_operand.vmem [shape: f32[2,8,256], index: 4, kind: output, shape index: {}]
  %s5 = sld [smem:[#allocation0]]
  $region49: #{conv_bn_relu_forward.1} parent=0
    _
  %s7 = ssub.s32 1, %s5
  %s8 = scalar_select 0, %s7, %s5
  loop: start=0, step=1, limit=4
  $region2: #{conv_bn_relu_forward.1} parent=0 // loop_pre_header
    _
  $region3: #{conv_bn_relu_forward.1} parent=0 // loop_header
    %s10 = sphi 0, %s14
    %p11 = scmp.ge.s32.totalorder %s10, 4
    %s17 = sphi 0, %s29
    %s18 = sphi 0, %s25
    %s19 = sphi 0, %s17
    %s20 = sphi 0, %s18
    %s21 = sphi 0, %s19
    %s22 = sphi 0, %s20
    %s34 = sphi 0, %s36
    %s37 = sphi 0, %s34
    %s38 = sphi 0, %s37
    %s54 = sphi 0, %s38
    %s58 = sphi 0, %s58
    %s60 = sphi 0, %s58
    %s61 = sphi 0, %s60
    %s75 = sphi 0, %s61
    %s79 = sphi 0, %s79
    %s81 = sphi 0, %s79
    %s82 = sphi 0, %s81
    %s96 = sphi 0, %s82
    %s100 = sphi 0, %s100
    %s102 = sphi 0, %s100
    %s103 = sphi 0, %s102
    %s117 = sphi 0, %s103
    %s125 = sphi 0, %s127
    %s128 = sphi 0, %s125
    %s129 = sphi 0, %s128
    %s145 = sphi 0, %s129
  $region4: #{conv_bn_relu_forward.1} parent=0 // loop_header_branch
    %13 = sbr.rel (%p11) target = $region8
  $region5: #{conv_bn_relu_forward.1} parent=0 // loop_body
    %s15 = ssub.s32 %s10, 1
    %s16 = ssub.s32 %s10, 2
    %s23 = sadd.s32 1, %s18
    %p24 = scmp.ge.s32.totalorder %s23, 1
    %s25 = scalar_select %p24, 0, %s23
    %s26 = sadd.s32 1, %s17
    %s27 = scalar_select %p24, %s26, %s17
    %p28 = scmp.ge.s32.totalorder %s27, 2
    %s29 = scalar_select %p28, 0, %s27
    %s30 = ssub.s32 %s17, %s29
    %s31 = ssub.s32 %s18, %s25
    %s32 = sor.u32 %s30, %s31
    %p33 = scmp.eq.s32.totalorder %s32, 0
    %s35 = sadd.s32 %s34, 1
    %s36 = scalar_select %p33, %s34, %s35
    %p39 = pneg %p33
    %p40 = scmp.eq.s32.totalorder %s10, 1
    %p41 = por %p39, %p40
    %p42 = scmp.ne.s32.totalorder %s34, %s37
    %p43 = scmp.eq.s32.totalorder %s10, 0
    %p44 = por %p42, %p43
    %p45 = scmp.ne.s32.totalorder %s34, %s37
    %p46 = scmp.eq.s32.totalorder %s15, 1
    %p47 = por %p45, %p46
    %p48 = scmp.ne.s32.totalorder %s37, %s38
    %p49 = scmp.eq.s32.totalorder %s15, 0
    %p50 = por %p48, %p49
    %p51 = scmp.ne.s32.totalorder %s37, %s38
    %p52 = scmp.eq.s32.totalorder %s16, 1
    %p53 = por %p51, %p52
    %p55 = scmp.ne.s32.totalorder %s38, %s54
    %p56 = scmp.eq.s32.totalorder %s16, 0
    %p57 = por %p55, %p56
    %s59 = sadd.s32 %s58, 1
    %p62 = scmp.eq.s32.totalorder %s10, 1
    %p63 = scmp.ne.s32.totalorder %s58, %s60
    %p64 = scmp.eq.s32.totalorder %s10, 0
    %p65 = por %p63, %p64
    %p66 = scmp.ne.s32.totalorder %s58, %s60
    %p67 = scmp.eq.s32.totalorder %s15, 1
    %p68 = por %p66, %p67
    %p69 = scmp.ne.s32.totalorder %s60, %s61
    %p70 = scmp.eq.s32.totalorder %s15, 0
    %p71 = por %p69, %p70
    %p72 = scmp.ne.s32.totalorder %s60, %s61
    %p73 = scmp.eq.s32.totalorder %s16, 1
    %p74 = por %p72, %p73
    %p76 = scmp.ne.s32.totalorder %s61, %s75
    %p77 = scmp.eq.s32.totalorder %s16, 0
    %p78 = por %p76, %p77
    %s80 = sadd.s32 %s79, 1
    %p83 = scmp.eq.s32.totalorder %s10, 1
    %p84 = scmp.ne.s32.totalorder %s79, %s81
    %p85 = scmp.eq.s32.totalorder %s10, 0
    %p86 = por %p84, %p85
    %p87 = scmp.ne.s32.totalorder %s79, %s81
    %p88 = scmp.eq.s32.totalorder %s15, 1
    %p89 = por %p87, %p88
    %p90 = scmp.ne.s32.totalorder %s81, %s82
    %p91 = scmp.eq.s32.totalorder %s15, 0
    %p92 = por %p90, %p91
    %p93 = scmp.ne.s32.totalorder %s81, %s82
    %p94 = scmp.eq.s32.totalorder %s16, 1
    %p95 = por %p93, %p94
    %p97 = scmp.ne.s32.totalorder %s82, %s96
    %p98 = scmp.eq.s32.totalorder %s16, 0
    %p99 = por %p97, %p98
    %s101 = sadd.s32 %s100, 1
    %p104 = scmp.eq.s32.totalorder %s10, 1
    %p105 = scmp.ne.s32.totalorder %s100, %s102
    %p106 = scmp.eq.s32.totalorder %s10, 0
    %p107 = por %p105, %p106
    %p108 = scmp.ne.s32.totalorder %s100, %s102
    %p109 = scmp.eq.s32.totalorder %s15, 1
    %p110 = por %p108, %p109
    %p111 = scmp.ne.s32.totalorder %s102, %s103
    %p112 = scmp.eq.s32.totalorder %s15, 0
    %p113 = por %p111, %p112
    %p114 = scmp.ne.s32.totalorder %s102, %s103
    %p115 = scmp.eq.s32.totalorder %s16, 1
    %p116 = por %p114, %p115
    %p118 = scmp.ne.s32.totalorder %s103, %s117
    %p119 = scmp.eq.s32.totalorder %s16, 0
    %p120 = por %p118, %p119
    %s121 = ssub.s32 %s17, %s29
    %s122 = ssub.s32 %s18, %s25
    %s123 = sor.u32 %s121, %s122
    %p124 = scmp.eq.s32.totalorder %s123, 0
    %s126 = sadd.s32 %s125, 1
    %s127 = scalar_select %p124, %s125, %s126
    %p130 = pneg %p124
    %p131 = scmp.eq.s32.totalorder %s10, 1
    %p132 = por %p130, %p131
    %p133 = scmp.ne.s32.totalorder %s125, %s128
    %p134 = scmp.eq.s32.totalorder %s10, 0
    %p135 = por %p133, %p134
    %p136 = scmp.ne.s32.totalorder %s125, %s128
    %p137 = scmp.eq.s32.totalorder %s15, 1
    %p138 = por %p136, %p137
    %p139 = scmp.ne.s32.totalorder %s128, %s129
    %p140 = scmp.eq.s32.totalorder %s15, 0
    %p141 = por %p139, %p140
    %p142 = scmp.ne.s32.totalorder %s128, %s129
    %p143 = scmp.eq.s32.totalorder %s16, 1
    %p144 = por %p142, %p143
    %p146 = scmp.ne.s32.totalorder %s129, %s145
    %p147 = scmp.eq.s32.totalorder %s16, 0
    %p148 = por %p146, %p147
    %p149 = scmp.le.s32.totalorder 1, %s10
    %p150 = scmp.lt.s32.totalorder %s10, 3
    %p151 = pnand %p149, %p150
    %p152 = pneg %p151
    // Predicated region
    $region9: #{conv_bn_relu_forward.1} parent=5 // pred_check
      _
    $region10: #{conv_bn_relu_forward.1} parent=5 // pred_check_branch
      %154 = sbr.rel (%p151) target = $region12
    $region11: #{conv_bn_relu_forward.1} parent=5 // pred_region
      %s155 = ssub.s32 %s10, 1
      // Predicated region
      $region13: #{conv_bn_relu_forward.1} parent=11 // pred_check
        %p156 = pneg %p71
      $region14: #{conv_bn_relu_forward.1} parent=11 // pred_check_branch
        %158 = sbr.rel (%p156) target = $region16
      $region15: #{conv_bn_relu_forward.1} parent=11 // pred_region
        _
      $region16: #{conv_bn_relu_forward.1} parent=11 // pred_fallthru
        _
      // Predicated region
      $region17: #{conv_bn_relu_forward.1} parent=11 // pred_check
        %p159 = pneg %p92
      $region18: #{conv_bn_relu_forward.1} parent=11 // pred_check_branch
        %161 = sbr.rel (%p159) target = $region20
      $region19: #{conv_bn_relu_forward.1} parent=11 // pred_region
        _
      $region20: #{conv_bn_relu_forward.1} parent=11 // pred_fallthru
        _
      // Predicated region
      $region21: #{conv_bn_relu_forward.1} parent=11 // pred_check
        %p162 = pneg %p113
      $region22: #{conv_bn_relu_forward.1} parent=11 // pred_check_branch
        %164 = sbr.rel (%p162) target = $region24
      $region23: #{conv_bn_relu_forward.1} parent=11 // pred_region
        _
      $region24: #{conv_bn_relu_forward.1} parent=11 // pred_fallthru
        _
    $region12: #{conv_bn_relu_forward.1} parent=5 // pred_fallthru
      _
    %p165 = scmp.lt.s32.totalorder %s10, 2
    // Predicated region
    $region25: #{conv_bn_relu_forward.1} parent=5 // pred_check
      %p166 = pneg %p165
    $region26: #{conv_bn_relu_forward.1} parent=5 // pred_check_branch
      %168 = sbr.rel (%p166) target = $region28
    $region27: #{conv_bn_relu_forward.1} parent=5 // pred_region
      // Predicated region
      $region29: #{conv_bn_relu_forward.1} parent=27 // pred_check
        %p169 = pneg %p44
      $region30: #{conv_bn_relu_forward.1} parent=27 // pred_check_branch
        %171 = sbr.rel (%p169) target = $region32
      $region31: #{conv_bn_relu_forward.1} parent=27 // pred_region
        %s172 = smul.u32 2, %s18
        %p173 = scmp.lt.s32.totalorder %s17, 1
        %s174 = scalar_select %p173, %s17, 1
        %p175 = scmp.lt.s32.totalorder %s172, 1
        %s176 = scalar_select %p175, %s172, 1
        %s177 = smul.addr %s174, 2
        %s178 = sadd.s32 %s176, %s177
        %s179 = smul.addr %s178, 4
        %s180 = scalar_lea.vmem %s0, %s179
        %s181 = smul.u32 2, %s18
      $region32: #{conv_bn_relu_forward.1} parent=27 // pred_fallthru
        _
    $region28: #{conv_bn_relu_forward.1} parent=5 // pred_fallthru
      _
    %p182 = scmp.le.s32.totalorder 1, %s10
    %p183 = scmp.lt.s32.totalorder %s10, 3
    %p184 = pnand %p182, %p183
    %p185 = pneg %p184
    // Predicated region
    $region33: #{conv_bn_relu_forward.1} parent=5 // pred_check
      _
    $region34: #{conv_bn_relu_forward.1} parent=5 // pred_check_branch
      %187 = sbr.rel (%p184) target = $region36
    $region35: #{conv_bn_relu_forward.1} parent=5 // pred_region
      %s188 = ssub.s32 %s10, 1
      %s189 = smul.u32 2, %s20
      %p190 = scmp.lt.s32.totalorder %s19, 1
      %s191 = scalar_select %p190, %s19, 1
      %p192 = scmp.lt.s32.totalorder %s189, 1
      %s193 = scalar_select %p192, %s189, 1
      %s194 = smul.addr %s191, 2
      %s195 = sadd.s32 %s193, %s194
      %s196 = smul.addr %s195, 4
      %s197 = scalar_lea.vmem %s0, %s196
      %p198 = pneg %p50
      %p199 = pneg %p47
      %p200 = pneg %p71
      %p201 = pneg %p68
      %p202 = pneg %p92
      %p203 = pneg %p89
      %p204 = pneg %p113
      %p205 = pneg %p110
      %p206 = pneg %p141
      %p207 = pneg %p138
      %s208 = smul.u32 2, %s20
      %p209 = scmp.lt.s32.totalorder %s19, 1
      %s210 = scalar_select %p209, %s19, 1
      %p211 = scmp.lt.s32.totalorder %s208, 1
      %s212 = scalar_select %p211, %s208, 1
      %s213 = smul.addr %s210, 2
      %s214 = sadd.s32 %s212, %s213
      %s215 = smul.addr %s214, 8
      %s216 = scalar_lea.vmem %s4, %s215
      %s217 = smul.u32 2, %s20
      %p218 = scmp.lt.s32.totalorder %s19, 1
      %s219 = scalar_select %p218, %s19, 1
      %p220 = scmp.lt.s32.totalorder %s217, 1
      %s221 = scalar_select %p220, %s217, 1
      %s222 = smul.addr %s219, 2
      %s223 = sadd.s32 %s221, %s222
      %s224 = smul.addr %s223, 4
      %s225 = scalar_lea.vmem %s0, %s224
      %s226 = smul.u32 2, %s20
      %s227 = smul.u32 2, %s20
      %p228 = scmp.lt.s32.totalorder %s19, 1
      %s229 = scalar_select %p228, %s19, 1
      %p230 = scmp.lt.s32.totalorder %s227, 1
      %s231 = scalar_select %p230, %s227, 1
      %s232 = smul.addr %s229, 2
      %s233 = sadd.s32 %s231, %s232
      %s234 = smul.addr %s233, 8
      %s235 = scalar_lea.vmem %s4, %s234
      %s236 = smul.u32 2, %s20
      %v237 = vld [vmem:[%s225] sm:$0xff]
      %v238 = vld [vmem:[%s1] sm:$0xff]
      %v240 = vcombine.high %v237, %v237
      %vm241 = vcmask 31744
      %v243 = vsel %vm241, %v238, 0
      %vm245 = vcmask 1043456
      %v246 = vsel %vm245, %v237, 0
      %v248 = vsel %vm245, %v240, 0
      %250 = vmatprep.subr.mxu0 0.0
      %251 = vmatpush1.msra.mxu0 0.0
      %252 = vmatprep.subr.mxu0 0.0
      %253 = vmatpush1.msra.mxu0 0.0
      %254 = vmatprep.subr.mxu0 0.0
      %255 = vmatpush1.msra.mxu0 0.0
      %256 = vmatprep.subr.mxu0 0.0
      %257 = vmatpush1.msra.mxu0 0.0
      %258 = vmatprep.subr.mxu0 0.0
      %259 = vmatpush1.msra.mxu0 0.0
      %260 = vmatprep.subr.mxu0 0.0
      %261 = vmatpush1.msra.mxu0 0.0
      %262 = vmatprep.subr.mxu0 0.0
      %263 = vmatpush1.msra.mxu0 0.0
      %264 = vmatprep.subr.mxu0 0.0
      %265 = vmatpush1.msra.mxu0 0.0
      %266 = vmatprep.subr.mxu0 0.0
      %267 = vmatpush1.msra.mxu0 0.0
      %268 = vmatprep.subr.mxu0 0.0
      %269 = vmatpush1.msra.mxu0 0.0
      %270 = vmatprep.subr.mxu0 0.0
      %271 = vmatpush1.msra.mxu0 0.0
      %272 = vmatprep.subr.mxu0 0.0
      %273 = vmatpush1.msra.mxu0 0.0
      %274 = vmatprep.subr.mxu0 0.0
      %275 = vmatpush1.msra.mxu0 0.0
      %276 = vmatprep.subr.mxu0 0.0
      %277 = vmatpush1.msra.mxu0 0.0
      %278 = vmatprep.subr.mxu0 0.0
      %279 = vmatpush1.msra.mxu0 0.0
      %280 = vmatprep.subr.mxu0 %v248
      %281 = vmatpush1.msra.mxu0 %v246
      %282 = vmatprep.subr.mxu0 0.0
      %283 = vmatpush2.msra.mxu0 0.0
      %284 = vmatprep.subr.mxu0 0.0
      %285 = vmatpush2.msra.mxu0 0.0
      %286 = vmatprep.subr.mxu0 0.0
      %287 = vmatpush2.msra.mxu0 0.0
      %288 = vmatprep.subr.mxu0 0.0
      %289 = vmatpush2.msra.mxu0 0.0
      %290 = vmatprep.subr.mxu0 0.0
      %291 = vmatpush2.msra.mxu0 0.0
      %292 = vmatprep.subr.mxu0 0.0
      %293 = vmatpush2.msra.mxu0 0.0
      %294 = vmatprep.subr.mxu0 0.0
      %295 = vmatpush2.msra.mxu0 0.0
      %296 = vmatprep.subr.mxu0 0.0
      %297 = vmatpush2.msra.mxu0 0.0
      %298 = vmatprep.subr.mxu0 0.0
      %299 = vmatpush2.msra.mxu0 0.0
      %300 = vmatprep.subr.mxu0 0.0
      %301 = vmatpush2.msra.mxu0 0.0
      %302 = vmatprep.subr.mxu0 0.0
      %303 = vmatpush2.msra.mxu0 0.0
      %304 = vmatprep.subr.mxu0 0.0
      %305 = vmatpush2.msra.mxu0 0.0
      %306 = vmatprep.subr.mxu0 0.0
      %307 = vmatpush2.msra.mxu0 0.0
      %308 = vmatprep.subr.mxu0 0.0
      %309 = vmatpush2.msra.mxu0 0.0
      %310 = vmatprep.subr.mxu0 0.0
      %311 = vmatpush2.msra.mxu0 0.0
      %312 = vmatprep.subr.mxu0 0.0
      %313 = vmatpush2.msra.mxu0 0.0
      %314 = vmatprep.mubr.f32.mxu0 0.0
      %315 = vmatmul.mubr.f32.gmra.mxu0 %v243
      %v316 = vpop.f32.mrf.mxu0
      %v317 = vadd.f32 0.0, %v316
      %v318 = vpop.f32.mrf.mxu0
      %v319 = vadd.f32 0.0, %v318
      %320 = vdwg.mxu0
      %v321 = vld [vmem:[%s2] sm:$0xff]
      %323 = vset.pattern.permute.xlu0 0
      %324 = vperm.xlu0 %323, %v321
      %v325 = vpop.permute.xlu0 %324
      %v327 = vmul.f32 %v317, %v325
      %v328 = vmul.f32 %v319, %v325
      %v329 = vld [vmem:[%s3] sm:$0xff]
      %331 = vset.pattern.permute.xlu0 0
      %332 = vperm.xlu0 %331, %v329
      %v333 = vpop.permute.xlu0 %332
      %v335 = vadd.f32 %v327, %v333
      %v336 = vadd.f32 %v328, %v333
      %v337 = vmax.f32 %v335, 0.0
      %v338 = vmax.f32 %v336, 0.0
      %339 = vst [vmem:[%s235] sm:$0xff] %v337
      %340 = vst [vmem:[%s235 + $0x8] sm:$0xff] %v338
      %s341 = smul.u32 2, %s20
      %p342 = scmp.lt.s32.totalorder %s19, 1
      %s343 = scalar_select %p342, %s19, 1
      %p344 = scmp.lt.s32.totalorder %s341, 1
      %s345 = scalar_select %p344, %s341, 1
      %s346 = smul.addr %s343, 2
      %s347 = sadd.s32 %s345, %s346
      %s348 = smul.addr %s347, 8
      %s349 = scalar_lea.vmem %s4, %s348
      // Predicated region
      $region37: #{conv_bn_relu_forward.1} parent=35 // pred_check
        %p350 = pneg %p138
      $region38: #{conv_bn_relu_forward.1} parent=35 // pred_check_branch
        %352 = sbr.rel (%p350) target = $region40
      $region39: #{conv_bn_relu_forward.1} parent=35 // pred_region
        %s353 = smul.u32 2, %s20
      $region40: #{conv_bn_relu_forward.1} parent=35 // pred_fallthru
        _
    $region36: #{conv_bn_relu_forward.1} parent=5 // pred_fallthru
      _
    %p354 = scmp.le.s32.totalorder 2, %s10
    // Predicated region
    $region41: #{conv_bn_relu_forward.1} parent=5 // pred_check
      %p355 = pneg %p354
    $region42: #{conv_bn_relu_forward.1} parent=5 // pred_check_branch
      %357 = sbr.rel (%p355) target = $region44
    $region43: #{conv_bn_relu_forward.1} parent=5 // pred_region
      %s358 = ssub.s32 %s10, 2
      // Predicated region
      $region45: #{conv_bn_relu_forward.1} parent=43 // pred_check
        %p359 = pneg %p144
      $region46: #{conv_bn_relu_forward.1} parent=43 // pred_check_branch
        %361 = sbr.rel (%p359) target = $region48
      $region47: #{conv_bn_relu_forward.1} parent=43 // pred_region
        %s362 = smul.u32 2, %s22
        %p363 = scmp.lt.s32.totalorder %s21, 1
        %s364 = scalar_select %p363, %s21, 1
        %p365 = scmp.lt.s32.totalorder %s362, 1
        %s366 = scalar_select %p365, %s362, 1
        %s367 = smul.addr %s364, 2
        %s368 = sadd.s32 %s366, %s367
        %s369 = smul.addr %s368, 8
        %s370 = scalar_lea.vmem %s4, %s369
      $region48: #{conv_bn_relu_forward.1} parent=43 // pred_fallthru
        _
    $region44: #{conv_bn_relu_forward.1} parent=5 // pred_fallthru
      _
  $region6: #{conv_bn_relu_forward.1} parent=0 // loop_footer
    %s14 = sadd.s32 1, %s10
  $region7: #{conv_bn_relu_forward.1} parent=0 // loop_footer_branch
    %9 = sbr.rel target = $region3
  $region8: #{conv_bn_relu_forward.1} parent=0 // loop_exit
    _

</llo_original>
